<compile_context>
chip_gen: v5e
topology: v5e:2x2
jax: 0.10.0
libtpu: 0.0.40
codegen_flags: <defaults>
</compile_context>

<pallas_src>
import jax
import jax.numpy as jnp
from jax.experimental import pallas as pl
from jax.experimental.pallas import tpu as pltpu

# TODO(synk): TensorRT engine/context creation, optimization-profile
# activation, binding-shape/pointer setup and execute_async_v2 CUDA-stream
# launch are host-side runtime plumbing with no Pallas equivalent; only the
# engine's compute (conv3x3 + bias + ReLU) is implemented here.


def _conv_kernel(cols_ref, w_ref, b_ref, o_ref):
    """relu(W @ cols + b), lane-dense in and out.

    cols_ref : (B_blk, 9*C_in, H*W)  im2col slabs, bf16  (H*W = 256 on lanes)
    w_ref    : (C_out, 9*C_in)       flattened weights, bf16 (resident)
    b_ref    : (C_out, 1)            bias, f32              (resident)
    o_ref    : (B_blk, C_out, H*W)   output, f32            (lane-dense store)
    """
    w = w_ref[...]                       # (C_out, 9C) bf16
    b = b_ref[...]                       # (C_out, 1)  f32
    for i in range(cols_ref.shape[0]):   # static unroll: 1 or 2 images / step
        acc = jnp.dot(w, cols_ref[i],    # single K=36 MXU dot -> (C_out, HW) f32
                      preferred_element_type=jnp.float32)
        o_ref[i, :, :] = jnp.maximum(acc + b, 0.0)


def _tensorcores_per_chip() -> int:
    """2 TensorCores per chip on v7x, 1 on v5e/v6e."""
    try:
        kind = jax.devices()[0].device_kind.lower()
    except Exception:
        return 1
    return 2 if "7" in kind else 1


def _build_conv_call(N, C_out, K, HW, steps):
    b_blk = N // steps
    if steps > 1:
        sem = (getattr(pltpu, "CORE_PARALLEL", pltpu.PARALLEL),)
    else:
        sem = (pltpu.ARBITRARY,)
    cost = pl.CostEstimate(
        flops=2 * N * HW * K * C_out,
        transcendentals=0,
        bytes_accessed=int(N * K * HW * 2          # bf16 im2col slabs
                           + C_out * K * 2         # bf16 weights
                           + C_out * 4             # f32 bias
                           + N * C_out * HW * 4),  # f32 output
    )
    return pl.pallas_call(
        _conv_kernel,
        out_shape=jax.ShapeDtypeStruct((N, C_out, HW), jnp.float32),
        grid_spec=pltpu.PrefetchScalarGridSpec(
            num_scalar_prefetch=0,
            grid=(steps,),
            in_specs=[
                # one batch-block of im2col slabs per step
                pl.BlockSpec((b_blk, K, HW), lambda s: (s, 0, 0)),
                # weights & bias stay resident across the whole grid
                pl.BlockSpec((C_out, K), lambda s: (0, 0)),
                pl.BlockSpec((C_out, 1), lambda s: (0, 0)),
            ],
            out_specs=pl.BlockSpec((b_blk, C_out, HW), lambda s: (s, 0, 0)),
        ),
        compiler_params=pltpu.CompilerParams(dimension_semantics=sem),
        cost_estimate=cost,
    )


def conv_bias_relu_pallas(x_nchw, weight, bias):
    """Conv2d(k=3, s=1, p=1) + bias + ReLU.  NCHW in, NCHW out."""
    N, C, H, W = x_nchw.shape
    C_out, C_in, kh, kw = weight.shape
    assert C_in == C and kh == 3 and kw == 3
    K = 9 * C
    HW = H * W

    # Wrapper glue (fused by XLA): bf16 cast, pad, im2col slab with spatial
    # (H*W) on the lane axis and (tap, channel) on the sublane axis.
    xb = x_nchw.astype(jnp.bfloat16)
    xp = jnp.pad(xb, ((0, 0), (0, 0), (1, 1), (1, 1)))         # (N, C, H+2, W+2)
    taps = [xp[:, :, dy:dy + H, dx:dx + W]                     # 9 x (N, C, H, W)
            for dy in range(3) for dx in range(3)]
    cols = jnp.stack(taps, axis=1).reshape(N, K, HW)           # (N, 9C, HW) bf16

    # Weights flattened to (C_out, (ky, kx, c)) to match the slab row order.
    w2 = jnp.transpose(weight, (0, 2, 3, 1)).reshape(C_out, K).astype(jnp.bfloat16)
    b2 = bias.reshape(C_out, 1).astype(jnp.float32)

    cores = _tensorcores_per_chip()
    preferred = cores if (cores > 1 and N % cores == 0) else 1
    attempts = (preferred, 1) if preferred != 1 else (1,)

    out = None
    for steps in attempts:
        try:
            out = jax.block_until_ready(
                _build_conv_call(N, C_out, K, HW, steps)(cols, w2, b2))
            break
        except Exception:
            if steps == attempts[-1]:
                raise
    # (N, C_out, H*W) -> (N, C_out, H, W): contiguous reshape, no data movement.
    return out.reshape(N, C_out, H, W)


class TRTModelPallas:
    """Mimics volksdep TRTModel.forward: runs the (synthetic) engine and
    returns a single tensor (a list if the engine had multiple outputs)."""

    def __init__(self, weight, bias):
        self.weight = weight
        self.bias = bias
        self.input_names = ["input_0"]
        self.output_names = ["output_0"]

    def forward(self, inputs):
        if not isinstance(inputs, (tuple, list)):
            inputs = [inputs]
        x = inputs[0]
        outputs = [conv_bias_relu_pallas(x, self.weight, self.bias)]
        if len(outputs) == 1:
            return outputs[0]
        return outputs

    __call__ = forward


if __name__ == "__main__":
    key = jax.random.PRNGKey(0)
    kx, kw_, kb = jax.random.split(key, 3)

    N, C_in, H, W = 2, 4, 16, 16
    C_out = 8

    x = jax.random.normal(kx, (N, C_in, H, W), dtype=jnp.float32)
    weight = 0.1 * jax.random.normal(kw_, (C_out, C_in, 3, 3), dtype=jnp.float32)
    bias = 0.1 * jax.random.normal(kb, (C_out,), dtype=jnp.float32)

    model = TRTModelPallas(weight, bias)
    out = model(x)
    out = jax.block_until_ready(out)

    # Reference with the same bf16-rounded inputs, f32 accumulation.
    xr = x.astype(jnp.bfloat16).astype(jnp.float32)
    wr = weight.astype(jnp.bfloat16).astype(jnp.float32)
    ref = jax.lax.conv_general_dilated(
        xr, wr, window_strides=(1, 1), padding="SAME",
        dimension_numbers=("NCHW", "OIHW", "NCHW"),
        precision=jax.lax.Precision.HIGHEST)
    ref = jnp.maximum(ref + bias.reshape(1, C_out, 1, 1), 0.0)

    assert out.shape == (N, C_out, H, W)
    err = float(jnp.max(jnp.abs(out - ref)))
    assert err < 2e-3, err

    print("KERNEL_OK")
</pallas_src>

<mosaic_0001>
module attributes {stable_mosaic.version = 11 : i64} {
  func.func @_conv_kernel(%arg0: i32, %arg1: memref<2x36x256xbf16, #tpu.memory_space<vmem>>, %arg2: memref<8x36xbf16, #tpu.memory_space<vmem>>, %arg3: memref<8x1xf32, #tpu.memory_space<vmem>>, %arg4: memref<2x8x256xf32, #tpu.memory_space<vmem>>) attributes {dimension_semantics = [#tpu.dimension_semantics<arbitrary>], iteration_bounds = array<i64: 1>, scalar_prefetch = 0 : i64, scratch_operands = 0 : i64, tpu.core_type = #tpu.core_type<tc>, window_params = [{transform_indices = @transform_0, window_bounds = array<i64: 2, 36, 256>}, {pipeline_mode = #tpu.pipeline_mode<synchronous>, transform_indices = @transform_1, window_bounds = array<i64: 8, 36>}, {pipeline_mode = #tpu.pipeline_mode<synchronous>, transform_indices = @transform_2, window_bounds = array<i64: 8, 1>}, {transform_indices = @transform_3, window_bounds = array<i64: 2, 8, 256>}]} {
    %c0 = arith.constant 0 : index
    %c0_0 = arith.constant 0 : index
    %0 = vector.load %arg2[%c0, %c0_0] : memref<8x36xbf16, #tpu.memory_space<vmem>>, vector<8x36xbf16>
    %c0_1 = arith.constant 0 : index
    %c0_2 = arith.constant 0 : index
    %1 = vector.load %arg3[%c0_1, %c0_2] : memref<8x1xf32, #tpu.memory_space<vmem>>, vector<8x1xf32>
    %c0_3 = arith.constant 0 : index
    %c0_4 = arith.constant 0 : index
    %c0_5 = arith.constant 0 : index
    %2 = vector.load %arg1[%c0_3, %c0_4, %c0_5] : memref<2x36x256xbf16, #tpu.memory_space<vmem>>, vector<1x36x256xbf16>
    %3 = vector.shape_cast %2 : vector<1x36x256xbf16> to vector<36x256xbf16>
    %cst = arith.constant dense<0.000000e+00> : vector<8x256xf32>
    %4 = tpu.matmul %0, %3, %cst {dimension_numbers = #tpu.dot_dimension_numbers<[1], [0], [0], [1], [0, 0, 1, 1], [], []>} : vector<8x36xbf16>, vector<36x256xbf16>, vector<8x256xf32> -> vector<8x256xf32>
    %5 = vector.broadcast %1 : vector<8x1xf32> to vector<8x256xf32>
    %6 = arith.addf %4, %5 : vector<8x256xf32>
    %cst_6 = arith.constant 0.000000e+00 : f32
    %7 = vector.broadcast %cst_6 : f32 to vector<8x256xf32>
    %8 = arith.maximumf %6, %7 : vector<8x256xf32>
    %c0_7 = arith.constant 0 : index
    %c0_8 = arith.constant 0 : index
    %c0_9 = arith.constant 0 : index
    %9 = vector.load %arg4[%c0_7, %c0_8, %c0_9] : memref<2x8x256xf32, #tpu.memory_space<vmem>>, vector<1x8x256xf32>
    %10 = vector.shape_cast %9 : vector<1x8x256xf32> to vector<8x256xf32>
    %11 = vector.shape_cast %8 : vector<8x256xf32> to vector<1x8x256xf32>
    tpu.vector_store %arg4[%c0_7, %c0_8, %c0_9], %11 {strides = array<i32>} : memref<2x8x256xf32, #tpu.memory_space<vmem>>, vector<1x8x256xf32>,
    %c1 = arith.constant 1 : index
    %c0_10 = arith.constant 0 : index
    %c0_11 = arith.constant 0 : index
    %12 = vector.load %arg1[%c1, %c0_10, %c0_11] : memref<2x36x256xbf16, #tpu.memory_space<vmem>>, vector<1x36x256xbf16>
    %13 = vector.shape_cast %12 : vector<1x36x256xbf16> to vector<36x256xbf16>
    %cst_12 = arith.constant dense<0.000000e+00> : vector<8x256xf32>
    %14 = tpu.matmul %0, %13, %cst_12 {dimension_numbers = #tpu.dot_dimension_numbers<[1], [0], [0], [1], [0, 0, 1, 1], [], []>} : vector<8x36xbf16>, vector<36x256xbf16>, vector<8x256xf32> -> vector<8x256xf32>
    %15 = vector.broadcast %1 : vector<8x1xf32> to vector<8x256xf32>
    %16 = arith.addf %14, %15 : vector<8x256xf32>
    %cst_13 = arith.constant 0.000000e+00 : f32
    %17 = vector.broadcast %cst_13 : f32 to vector<8x256xf32>
    %18 = arith.maximumf %16, %17 : vector<8x256xf32>
    %c1_14 = arith.constant 1 : index
    %c0_15 = arith.constant 0 : index
    %c0_16 = arith.constant 0 : index
    %19 = vector.load %arg4[%c1_14, %c0_15, %c0_16] : memref<2x8x256xf32, #tpu.memory_space<vmem>>, vector<1x8x256xf32>
    %20 = vector.shape_cast %19 : vector<1x8x256xf32> to vector<8x256xf32>
    %21 = vector.shape_cast %18 : vector<8x256xf32> to vector<1x8x256xf32>
    tpu.vector_store %arg4[%c1_14, %c0_15, %c0_16], %21 {strides = array<i32>} : memref<2x8x256xf32, #tpu.memory_space<vmem>>, vector<1x8x256xf32>,
    return
  }
  func.func @transform_0(%arg0: i32) -> (i32, i32, i32) {
    %c0_i32 = arith.constant 0 : i32
    %c0_i32_0 = arith.constant 0 : i32
    %c0_i32_1 = arith.constant 0 : i32
    return %arg0, %c0_i32, %c0_i32_0 : i32, i32, i32
  }
  func.func @transform_1(%arg0: i32) -> (i32, i32) {
    %c0_i32 = arith.constant 0 : i32
    %c0_i32_0 = arith.constant 0 : i32
    %c0_i32_1 = arith.constant 0 : i32
    return %c0_i32, %c0_i32_0 : i32, i32
  }
  func.func @transform_2(%arg0: i32) -> (i32, i32) {
    %c0_i32 = arith.constant 0 : i32
    %c0_i32_0 = arith.constant 0 : i32
    %c0_i32_1 = arith.constant 0 : i32
    return %c0_i32, %c0_i32_0 : i32, i32
  }
  func.func @transform_3(%arg0: i32) -> (i32, i32, i32) {
    %c0_i32 = arith.constant 0 : i32
    %c0_i32_0 = arith.constant 0 : i32
    %c0_i32_1 = arith.constant 0 : i32
    return %arg0, %c0_i32, %c0_i32_0 : i32, i32, i32
  }
}

</mosaic_0001>

<llo_original>
// kernel: tpu_custom_call.1
$region0: #{tpu_custom_call.1}
  #allocation0 [shape = 'u32[]', space=smem, size = 0x4, offset = 0x4, fixed_abs, tag = 'smem constant byte address 0x4 - core index']
  #allocation1 [shape = 'u32[72,128]{1,0:T(1,128)}', space=vmem, size = 0x9000, scoped, tag = 'internal scratch']
  %s0 = inlined_call_operand.vmem [shape: bf16[2,36,256], index: 0, kind: input, shape index: {}]
  %s1 = inlined_call_operand.vmem [shape: bf16[8,36], index: 1, kind: input, shape index: {}]
  %s2 = inlined_call_operand.vmem [shape: f32[8,1], index: 2, kind: input, shape index: {}]
  %s3 = inlined_call_operand.hbm [shape: f32[2,8,256], index: 3, kind: output, shape index: {}]
  %s4 = sld [smem:[#allocation0]]
  $region22: #{tpu_custom_call.1} parent=0
    _
  %s6 = ssub.s32 1, %s4
  %s7 = scalar_select 0, %s6, %s4
  $region1: #{tpu_custom_call.1} parent=0
    #allocation2 [shape = 'u8[16384]{0}', space=vmem, size = 0x4000, scoped, tag = 'output window, operand 0, single buffered']
    #allocation3 [shape = 's32[1]{0}', space=sflag, size = 0x4, scoped, tag = 'scoped memory for tpu_custom_call.1']
    %8 = vsyncpa [#allocation3], 0
    // Predicated region
    $region2: #{tpu_custom_call.1} parent=1 // pred_check
      _
    $region3: #{tpu_custom_call.1} parent=1 // pred_check_branch
      %10 = sbr.rel (0) target = $region5
    $region4: #{tpu_custom_call.1} parent=1 // pred_region
      _
    $region5: #{tpu_custom_call.1} parent=1 // pred_fallthru
      _
    // Predicated region
    $region6: #{tpu_custom_call.1} parent=1 // pred_check
      _
    $region7: #{tpu_custom_call.1} parent=1 // pred_check_branch
      %12 = sbr.rel (0) target = $region9
    $region8: #{tpu_custom_call.1} parent=1 // pred_region
      _
    $region9: #{tpu_custom_call.1} parent=1 // pred_fallthru
      _
    // Predicated region
    $region10: #{tpu_custom_call.1} parent=1 // pred_check
      _
    $region11: #{tpu_custom_call.1} parent=1 // pred_check_branch
      %14 = sbr.rel (0) target = $region13
    $region12: #{tpu_custom_call.1} parent=1 // pred_region
      _
    $region13: #{tpu_custom_call.1} parent=1 // pred_fallthru
      _
    %v16 = vld [vmem:[%s1] sm:$0xf]
    %v17 = vld [vmem:[%s2] sm:$0xff]
    %v18 = vld [vmem:[%s0] sm:$0xff]
    %v19 = vld [vmem:[%s0 + $0x8] sm:$0xff]
    %v20 = vld [vmem:[%s0 + $0x10] sm:$0xff]
    %v21 = vld [vmem:[%s0 + $0x18] sm:$0xff]
    %v22 = vld [vmem:[%s0 + $0x20] sm:$0x33]
    %24 = vset.pattern.permute.xlu0 0
    %25 = vperm.xlu0 %24, %v17
    %v26 = vpop.permute.xlu0 %25
    %v33 = vunpack.c.l.b16 %v18
    %v34 = vunpack.c.h.b16 %v18
    %v35 = vunpack.c.l.b16 %v19
    %v36 = vunpack.c.h.b16 %v19
    %v37 = vunpack.c.l.b16 %v20
    %v38 = vunpack.c.h.b16 %v20
    %v39 = vunpack.c.l.b16 %v21
    %v40 = vunpack.c.h.b16 %v21
    %v41 = vunpack.c.l.b16 %v22
    %v42 = vunpack.c.h.b16 %v22
    %v43 = vpack.c.b16 %v35, %v33
    %v44 = vpack.c.b16 %v36, %v34
    %v45 = vpack.c.b16 %v39, %v37
    %v46 = vpack.c.b16 %v40, %v38
    %v47 = vpack.c.b16 %v41, %v41
    %v48 = vpack.c.b16 %v42, %v42
    %vm53 = vcmask 293888
    %v55 = vsel %vm53, %v16, 0
    %vm57 = vcmask 1041408
    %v59 = vsel %vm57, %v47, 0
    %v62 = vsel %vm57, %v48, 0
    %64 = vmatpush.bf16.msra.mxu0 0
    %65 = vmatpush.bf16.msra.mxu0 0
    %66 = vmatpush.bf16.msra.mxu0 0
    %67 = vmatpush.bf16.msra.mxu0 0
    %68 = vmatpush.bf16.msra.mxu0 0
    %69 = vmatpush.bf16.msra.mxu0 %v59
    %70 = vmatpush.bf16.msra.mxu0 %v45
    %71 = vmatpush.bf16.msra.mxu0 %v43
    %72 = vmatmul.bf16.gmra.mxu0 %v55
    %v73 = vpop.f32.mrf.mxu0
    %v74 = vadd.f32 %v26, %v73
    %v75 = vpop.f32.mrf.mxu0
    %76 = vdwg.mxu0
    %77 = vmatpush.bf16.msra.mxu0 0
    %78 = vmatpush.bf16.msra.mxu0 0
    %79 = vmatpush.bf16.msra.mxu0 0
    %80 = vmatpush.bf16.msra.mxu0 0
    %81 = vmatpush.bf16.msra.mxu0 0
    %82 = vmatpush.bf16.msra.mxu0 %v62
    %83 = vmatpush.bf16.msra.mxu0 %v46
    %84 = vmatpush.bf16.msra.mxu0 %v44
    %85 = vmatmul.bf16.gmra.mxu0 %v55
    %v86 = vpop.f32.mrf.mxu0
    %v87 = vadd.f32 %v26, %v86
    %v88 = vpop.f32.mrf.mxu0
    %89 = vdwg.mxu0
    %v90 = vmax.f32 %v74, 0.0
    %v91 = vmax.f32 %v87, 0.0
    %92 = vst [vmem:[#allocation2] sm:$0xff] %v90
    %93 = vst [vmem:[#allocation2 + $0x8] sm:$0xff] %v91
    %s94 = scalar_lea.vmem %s0, 40
    %v95 = vld [vmem:[%s94] sm:$0xff]
    %v96 = vld [vmem:[%s94 + $0x8] sm:$0xff]
    %v97 = vld [vmem:[%s94 + $0x10] sm:$0xff]
    %v98 = vld [vmem:[%s94 + $0x18] sm:$0xff]
    %v99 = vld [vmem:[%s94 + $0x20] sm:$0x33]
    %v105 = vunpack.c.l.b16 %v95
    %v106 = vunpack.c.h.b16 %v95
    %v107 = vunpack.c.l.b16 %v96
    %v108 = vunpack.c.h.b16 %v96
    %v109 = vunpack.c.l.b16 %v97
    %v110 = vunpack.c.h.b16 %v97
    %v111 = vunpack.c.l.b16 %v98
    %v112 = vunpack.c.h.b16 %v98
    %v113 = vunpack.c.l.b16 %v99
    %v114 = vunpack.c.h.b16 %v99
    %v115 = vpack.c.b16 %v107, %v105
    %v116 = vpack.c.b16 %v108, %v106
    %v117 = vpack.c.b16 %v111, %v109
    %v118 = vpack.c.b16 %v112, %v110
    %v119 = vpack.c.b16 %v113, %v113
    %v120 = vpack.c.b16 %v114, %v114
    %v126 = vsel %vm57, %v119, 0
    %v129 = vsel %vm57, %v120, 0
    %131 = vmatpush.bf16.msra.mxu0 0
    %132 = vmatpush.bf16.msra.mxu0 0
    %133 = vmatpush.bf16.msra.mxu0 0
    %134 = vmatpush.bf16.msra.mxu0 0
    %135 = vmatpush.bf16.msra.mxu0 0
    %136 = vmatpush.bf16.msra.mxu0 %v126
    %137 = vmatpush.bf16.msra.mxu0 %v117
    %138 = vmatpush.bf16.msra.mxu0 %v115
    %139 = vmatmul.bf16.gmra.mxu0 %v55
    %v140 = vpop.f32.mrf.mxu0
    %v141 = vadd.f32 %v26, %v140
    %v142 = vpop.f32.mrf.mxu0
    %143 = vdwg.mxu0
    %144 = vmatpush.bf16.msra.mxu0 0
    %145 = vmatpush.bf16.msra.mxu0 0
    %146 = vmatpush.bf16.msra.mxu0 0
    %147 = vmatpush.bf16.msra.mxu0 0
    %148 = vmatpush.bf16.msra.mxu0 0
    %149 = vmatpush.bf16.msra.mxu0 %v129
    %150 = vmatpush.bf16.msra.mxu0 %v118
    %151 = vmatpush.bf16.msra.mxu0 %v116
    %152 = vmatmul.bf16.gmra.mxu0 %v55
    %v153 = vpop.f32.mrf.mxu0
    %v154 = vadd.f32 %v26, %v153
    %v155 = vpop.f32.mrf.mxu0
    %156 = vdwg.mxu0
    %v157 = vmax.f32 %v141, 0.0
    %v158 = vmax.f32 %v154, 0.0
    %s159 = scalar_lea.vmem [#allocation2], 16
    %160 = vst [vmem:[%s159] sm:$0xff] %v157
    %161 = vst [vmem:[%s159 + $0x8] sm:$0xff] %v158
    // Predicated region
    $region14: #{tpu_custom_call.1} parent=1 // pred_check
      _
    $region15: #{tpu_custom_call.1} parent=1 // pred_check_branch
      %163 = sbr.rel (0) target = $region17
    $region16: #{tpu_custom_call.1} parent=1 // pred_region
      %165 = vsyncadd [#allocation3], 0
      %s166 = sshll.u32 [#allocation2], 4
      %s167 = int_to_ptr.vmem [resolvable:$true] %s166
      %s168 = sshll.u32 %s3, 4
      %s169 = int_to_ptr.hbm [resolvable:$true] %s168
      %174 = dma.vmem_to_hbm [thread:$0]  %s167, 512, %s169, [#allocation3], 256, 256, 16
    $region17: #{tpu_custom_call.1} parent=1 // pred_fallthru
      _
    // Predicated region
    $region18: #{tpu_custom_call.1} parent=1 // pred_check
      _
    $region19: #{tpu_custom_call.1} parent=1 // pred_check_branch
      %176 = sbr.rel (0) target = $region21
    $region20: #{tpu_custom_call.1} parent=1 // pred_region
      %178 = dma.done [#allocation3], 512
    $region21: #{tpu_custom_call.1} parent=1 // pred_fallthru
      _
    %179 = vsyncpa [#allocation3], 1

</llo_original>
